<compile_context>
chip_gen: v7x
topology: tpu7x:2x2x1
jax: 0.10.0
libtpu: 0.0.40
codegen_flags: <defaults>
</compile_context>

<pallas_src>
import functools

import jax
import jax.numpy as jnp
from jax.experimental import pallas as pl
from jax.experimental.pallas import tpu as pltpu

LANE = 128
SUBLANE = 8


def _round_up(x, m):
    return (x + m - 1) // m * m


def event_model_kernel(verb_ref, subj_ref, obj_ref, date_ref, w_ref, b_ref,
                       out_ref, *, d):
    # Weight is (4*D, O_pad) bf16, resident in VMEM across all batch tiles.
    w = w_ref[...]
    # Fold the bias into the accumulator init (broadcasts (1, O_pad) -> (TB, O_pad)).
    acc = b_ref[...].astype(jnp.float32)
    # Four partial matmuls replace torch.cat + one matmul: the MXU accumulates for
    # free and no cross-lane concat / XLU shuffle is needed. bf16 operands,
    # f32 accumulation. Static slices at multiples of 16 sublanes -> tile-aligned.
    acc = acc + jnp.dot(verb_ref[...].astype(jnp.bfloat16), w[0 * d:1 * d, :],
                        preferred_element_type=jnp.float32)
    acc = acc + jnp.dot(subj_ref[...].astype(jnp.bfloat16), w[1 * d:2 * d, :],
                        preferred_element_type=jnp.float32)
    acc = acc + jnp.dot(obj_ref[...].astype(jnp.bfloat16), w[2 * d:3 * d, :],
                        preferred_element_type=jnp.float32)
    acc = acc + jnp.dot(date_ref[...].astype(jnp.bfloat16), w[3 * d:4 * d, :],
                        preferred_element_type=jnp.float32)
    # ReLU epilogue in f32 on the VPU (v5e has no bf16 VPU path).
    out_ref[...] = jnp.maximum(acc, 0.0)
    # TODO(synk): nn.Dropout(0.1) is identity in eval mode; training-mode stochastic
    # dropout (pltpu.prng_seed + pltpu.prng_random_bits mask/scale) is not applied.


def event_model_forward(verb, subj, obj, date, w, b, *, block_batch=512):
    """Fused (concat-free) linear + ReLU.

    verb/subj/obj/date: (B, D) f32
    w: (4*D, O) f32 (pre-transposed for the kernel)
    b: (1, O) f32
    Returns (B, O) f32.
    """
    B, D = verb.shape
    four_d, O = w.shape
    assert four_d == 4 * D

    # Lane-dense output: zero-pad O up to a multiple of 128; slice result back.
    O_pad = _round_up(O, LANE)
    if O_pad != O:
        w = jnp.pad(w, ((0, 0), (0, O_pad - O)))
        b = jnp.pad(b, ((0, 0), (0, O_pad - O)))
    w = w.astype(jnp.bfloat16)   # halves weight HBM traffic; accumulation stays f32
    b = b.astype(jnp.float32)

    # Batch tile: sublane-aligned; default 512 rows keeps 2x double-buffered
    # (inputs + output) tiles well under v7x's smaller VMEM budget.
    TB = min(block_batch, _round_up(B, SUBLANE))
    B_pad = _round_up(B, TB)
    if B_pad != B:
        pad_rows = lambda a: jnp.pad(a, ((0, B_pad - B), (0, 0)))
        verb, subj, obj, date = map(pad_rows, (verb, subj, obj, date))

    grid = (B_pad // TB,)
    in_spec = pl.BlockSpec((TB, D), lambda i: (i, 0))
    w_spec = pl.BlockSpec((4 * D, O_pad), lambda i: (0, 0))   # VMEM-resident
    b_spec = pl.BlockSpec((1, O_pad), lambda i: (0, 0))       # VMEM-resident
    out_spec = pl.BlockSpec((TB, O_pad), lambda i: (i, 0))

    flops = 2 * B_pad * (4 * D) * O_pad
    bytes_accessed = (4 * B_pad * D * 4      # four f32 inputs
                      + 4 * D * O_pad * 2    # bf16 weight
                      + O_pad * 4            # f32 bias
                      + B_pad * O_pad * 4)   # f32 output

    out = pl.pallas_call(
        functools.partial(event_model_kernel, d=D),
        out_shape=jax.ShapeDtypeStruct((B_pad, O_pad), jnp.float32),
        grid=grid,
        in_specs=[in_spec, in_spec, in_spec, in_spec, w_spec, b_spec],
        out_specs=out_spec,
        compiler_params=pltpu.CompilerParams(
            dimension_semantics=("parallel",)),   # shards batch tiles over v7x's 2 TCs
        cost_estimate=pl.CostEstimate(flops=flops, transcendentals=0,
                                      bytes_accessed=bytes_accessed),
    )(verb, subj, obj, date, w, b)
    return out[:B, :O]


def init_params(key, input_size, output_size):
    """Deterministic init mimicking nn.Linear: U(-1/sqrt(fan_in), 1/sqrt(fan_in))."""
    fan_in = input_size * 4
    bound = 1.0 / jnp.sqrt(jnp.float32(fan_in))
    kw, kb = jax.random.split(key)
    # Kernel consumes the weight pre-transposed: (4*input_size, output_size).
    w = jax.random.uniform(kw, (fan_in, output_size), jnp.float32, -bound, bound)
    b = jax.random.uniform(kb, (1, output_size), jnp.float32, -bound, bound)
    return w, b


if __name__ == "__main__":
    key = jax.random.PRNGKey(0)
    k_verb, k_subj, k_obj, k_date, k_param = jax.random.split(key, 5)

    batch = 2
    input_size = 32    # per-vector feature size
    output_size = 16

    verb = jax.random.normal(k_verb, (batch, input_size), jnp.float32)
    subj = jax.random.normal(k_subj, (batch, input_size), jnp.float32)
    obj = jax.random.normal(k_obj, (batch, input_size), jnp.float32)
    date = jax.random.normal(k_date, (batch, input_size), jnp.float32)

    w, b = init_params(k_param, input_size, output_size)

    out = event_model_forward(verb, subj, obj, date, w, b)
    jax.block_until_ready(out)

    # Pure-JAX f32 reference check (tolerance loosened for bf16 MXU operands).
    x = jnp.concatenate([verb, subj, obj, date], axis=1)
    ref = jnp.maximum(x @ w + b, 0.0)
    assert out.shape == (batch, output_size)
    assert jnp.allclose(out, ref, atol=2e-2, rtol=2e-2), (
        f"max abs err {jnp.max(jnp.abs(out - ref))}")

    print("KERNEL_OK")
</pallas_src>

<mosaic_0001>
module attributes {stable_mosaic.version = 11 : i64} {
  func.func @event_model_kernel(%arg0: i32, %arg1: memref<8x32xf32, #tpu.memory_space<vmem>>, %arg2: memref<8x32xf32, #tpu.memory_space<vmem>>, %arg3: memref<8x32xf32, #tpu.memory_space<vmem>>, %arg4: memref<8x32xf32, #tpu.memory_space<vmem>>, %arg5: memref<128x128xbf16, #tpu.memory_space<vmem>>, %arg6: memref<1x128xf32, #tpu.memory_space<vmem>>, %arg7: memref<8x128xf32, #tpu.memory_space<vmem>>) attributes {dimension_semantics = [#tpu.dimension_semantics<parallel>], iteration_bounds = array<i64: 1>, scalar_prefetch = 0 : i64, scratch_operands = 0 : i64, tpu.core_type = #tpu.core_type<tc>, window_params = [{transform_indices = @transform_0, window_bounds = array<i64: 8, 32>}, {transform_indices = @transform_1, window_bounds = array<i64: 8, 32>}, {transform_indices = @transform_2, window_bounds = array<i64: 8, 32>}, {transform_indices = @transform_3, window_bounds = array<i64: 8, 32>}, {pipeline_mode = #tpu.pipeline_mode<synchronous>, transform_indices = @transform_4, window_bounds = array<i64: 128, 128>}, {pipeline_mode = #tpu.pipeline_mode<synchronous>, transform_indices = @transform_5, window_bounds = array<i64: 1, 128>}, {transform_indices = @transform_6, window_bounds = array<i64: 8, 128>}]} {
    %c0 = arith.constant 0 : index
    %c0_0 = arith.constant 0 : index
    %0 = vector.load %arg5[%c0, %c0_0] : memref<128x128xbf16, #tpu.memory_space<vmem>>, vector<128x128xbf16>
    %c0_1 = arith.constant 0 : index
    %c0_2 = arith.constant 0 : index
    %1 = vector.load %arg6[%c0_1, %c0_2] : memref<1x128xf32, #tpu.memory_space<vmem>>, vector<1x128xf32>
    %c0_3 = arith.constant 0 : index
    %c0_4 = arith.constant 0 : index
    %2 = vector.load %arg1[%c0_3, %c0_4] : memref<8x32xf32, #tpu.memory_space<vmem>>, vector<8x32xf32>
    %3 = arith.truncf %2 : vector<8x32xf32> to vector<8x32xbf16>
    %4 = vector.extract_strided_slice %0 {offsets = [0, 0], sizes = [32, 128], strides = [1, 1]} : vector<128x128xbf16> to vector<32x128xbf16>
    %cst = arith.constant dense<0.000000e+00> : vector<8x128xf32>
    %5 = tpu.matmul %3, %4, %cst {dimension_numbers = #tpu.dot_dimension_numbers<[1], [0], [0], [1], [0, 0, 1, 1], [], []>} : vector<8x32xbf16>, vector<32x128xbf16>, vector<8x128xf32> -> vector<8x128xf32>
    %6 = vector.broadcast %1 : vector<1x128xf32> to vector<8x128xf32>
    %7 = arith.addf %6, %5 : vector<8x128xf32>
    %c0_5 = arith.constant 0 : index
    %c0_6 = arith.constant 0 : index
    %8 = vector.load %arg2[%c0_5, %c0_6] : memref<8x32xf32, #tpu.memory_space<vmem>>, vector<8x32xf32>
    %9 = arith.truncf %8 : vector<8x32xf32> to vector<8x32xbf16>
    %10 = vector.extract_strided_slice %0 {offsets = [32, 0], sizes = [32, 128], strides = [1, 1]} : vector<128x128xbf16> to vector<32x128xbf16>
    %cst_7 = arith.constant dense<0.000000e+00> : vector<8x128xf32>
    %11 = tpu.matmul %9, %10, %cst_7 {dimension_numbers = #tpu.dot_dimension_numbers<[1], [0], [0], [1], [0, 0, 1, 1], [], []>} : vector<8x32xbf16>, vector<32x128xbf16>, vector<8x128xf32> -> vector<8x128xf32>
    %12 = arith.addf %7, %11 : vector<8x128xf32>
    %c0_8 = arith.constant 0 : index
    %c0_9 = arith.constant 0 : index
    %13 = vector.load %arg3[%c0_8, %c0_9] : memref<8x32xf32, #tpu.memory_space<vmem>>, vector<8x32xf32>
    %14 = arith.truncf %13 : vector<8x32xf32> to vector<8x32xbf16>
    %15 = vector.extract_strided_slice %0 {offsets = [64, 0], sizes = [32, 128], strides = [1, 1]} : vector<128x128xbf16> to vector<32x128xbf16>
    %cst_10 = arith.constant dense<0.000000e+00> : vector<8x128xf32>
    %16 = tpu.matmul %14, %15, %cst_10 {dimension_numbers = #tpu.dot_dimension_numbers<[1], [0], [0], [1], [0, 0, 1, 1], [], []>} : vector<8x32xbf16>, vector<32x128xbf16>, vector<8x128xf32> -> vector<8x128xf32>
    %17 = arith.addf %12, %16 : vector<8x128xf32>
    %c0_11 = arith.constant 0 : index
    %c0_12 = arith.constant 0 : index
    %18 = vector.load %arg4[%c0_11, %c0_12] : memref<8x32xf32, #tpu.memory_space<vmem>>, vector<8x32xf32>
    %19 = arith.truncf %18 : vector<8x32xf32> to vector<8x32xbf16>
    %20 = vector.extract_strided_slice %0 {offsets = [96, 0], sizes = [32, 128], strides = [1, 1]} : vector<128x128xbf16> to vector<32x128xbf16>
    %cst_13 = arith.constant dense<0.000000e+00> : vector<8x128xf32>
    %21 = tpu.matmul %19, %20, %cst_13 {dimension_numbers = #tpu.dot_dimension_numbers<[1], [0], [0], [1], [0, 0, 1, 1], [], []>} : vector<8x32xbf16>, vector<32x128xbf16>, vector<8x128xf32> -> vector<8x128xf32>
    %22 = arith.addf %17, %21 : vector<8x128xf32>
    %cst_14 = arith.constant 0.000000e+00 : f32
    %23 = vector.broadcast %cst_14 : f32 to vector<8x128xf32>
    %24 = arith.maximumf %22, %23 : vector<8x128xf32>
    %c0_15 = arith.constant 0 : index
    %c0_16 = arith.constant 0 : index
    %25 = vector.load %arg7[%c0_15, %c0_16] : memref<8x128xf32, #tpu.memory_space<vmem>>, vector<8x128xf32>
    tpu.vector_store %arg7[%c0_15, %c0_16], %24 {strides = array<i32>} : memref<8x128xf32, #tpu.memory_space<vmem>>, vector<8x128xf32>,
    return
  }
  func.func @transform_0(%arg0: i32) -> (i32, i32) {
    %c0_i32 = arith.constant 0 : i32
    %c0_i32_0 = arith.constant 0 : i32
    return %arg0, %c0_i32 : i32, i32
  }
  func.func @transform_1(%arg0: i32) -> (i32, i32) {
    %c0_i32 = arith.constant 0 : i32
    %c0_i32_0 = arith.constant 0 : i32
    return %arg0, %c0_i32 : i32, i32
  }
  func.func @transform_2(%arg0: i32) -> (i32, i32) {
    %c0_i32 = arith.constant 0 : i32
    %c0_i32_0 = arith.constant 0 : i32
    return %arg0, %c0_i32 : i32, i32
  }
  func.func @transform_3(%arg0: i32) -> (i32, i32) {
    %c0_i32 = arith.constant 0 : i32
    %c0_i32_0 = arith.constant 0 : i32
    return %arg0, %c0_i32 : i32, i32
  }
  func.func @transform_4(%arg0: i32) -> (i32, i32) {
    %c0_i32 = arith.constant 0 : i32
    %c0_i32_0 = arith.constant 0 : i32
    %c0_i32_1 = arith.constant 0 : i32
    return %c0_i32, %c0_i32_0 : i32, i32
  }
  func.func @transform_5(%arg0: i32) -> (i32, i32) {
    %c0_i32 = arith.constant 0 : i32
    %c0_i32_0 = arith.constant 0 : i32
    %c0_i32_1 = arith.constant 0 : i32
    return %c0_i32, %c0_i32_0 : i32, i32
  }
  func.func @transform_6(%arg0: i32) -> (i32, i32) {
    %c0_i32 = arith.constant 0 : i32
    %c0_i32_0 = arith.constant 0 : i32
    return %arg0, %c0_i32 : i32, i32
  }
}

</mosaic_0001>

<llo_original>
// kernel: tpu_custom_call.1
$region0: #{tpu_custom_call.1}
  #allocation0 [shape = 'u32[]', space=smem, size = 0x4, offset = 0x4, fixed_abs, tag = 'smem constant byte address 0x4 - core index']
  #allocation1 [shape = 'u32[144,128]{1,0:T(1,128)}', space=vmem, size = 0x12000, scoped, tag = 'internal scratch']
  %s0 = inlined_call_operand.hbm [shape: f32[8,32], index: 0, kind: input, shape index: {}]
  %s1 = inlined_call_operand.hbm [shape: f32[8,32], index: 1, kind: input, shape index: {}]
  %s2 = inlined_call_operand.hbm [shape: f32[8,32], index: 2, kind: input, shape index: {}]
  %s3 = inlined_call_operand.vmem [shape: f32[8,32], index: 3, kind: input, shape index: {}]
  %s4 = inlined_call_operand.hbm [shape: bf16[128,128], index: 4, kind: input, shape index: {}]
  %s5 = inlined_call_operand.vmem [shape: f32[1,128], index: 5, kind: input, shape index: {}]
  %s6 = inlined_call_operand.hbm [shape: f32[8,128], index: 6, kind: output, shape index: {}]
  %s7 = sld [smem:[#allocation0]]
  $region50: #{tpu_custom_call.1} parent=0
    _
  %s9 = ssub.s32 1, %s7
  %s10 = scalar_select 0, %s9, %s7
  $region1: #{tpu_custom_call.1} parent=0
    #allocation2 [shape = 'u8[4096]{0}', space=vmem, size = 0x1000, scoped, tag = 'input window, operand 0, single buffered']
    #allocation3 [shape = 's32[1]{0}', space=sflag, size = 0x4, scoped, tag = 'scoped memory for tpu_custom_call.1']
    #allocation4 [shape = 's32[1]{0}', space=sflag, size = 0x4, scoped, tag = 'scoped memory for tpu_custom_call.1']
    #allocation5 [shape = 'u8[4096]{0}', space=vmem, size = 0x1000, scoped, tag = 'input window, operand 1, single buffered']
    #allocation6 [shape = 's32[1]{0}', space=sflag, size = 0x4, scoped, tag = 'scoped memory for tpu_custom_call.1']
    #allocation7 [shape = 'u8[4096]{0}', space=vmem, size = 0x1000, scoped, tag = 'input window, operand 2, single buffered']
    #allocation8 [shape = 'u8[32768]{0}', space=vmem, size = 0x8000, scoped, tag = 'input window, operand 4, single buffered']
    #allocation9 [shape = 's32[1]{0}', space=sflag, size = 0x4, scoped, tag = 'scoped memory for tpu_custom_call.1']
    #allocation10 [shape = 'u8[4096]{0}', space=vmem, size = 0x1000, scoped, tag = 'output window, operand 0, single buffered']
    %11 = vsyncpa [#allocation3], 0
    %12 = vsyncpa [#allocation6], 0
    %13 = vsyncpa [#allocation9], 0
    %14 = vsyncpa [#allocation4], 0
    // Predicated region
    $region2: #{tpu_custom_call.1} parent=1 // pred_check
      _
    $region3: #{tpu_custom_call.1} parent=1 // pred_check_branch
      %16 = sbr.rel (0) target = $region5
    $region4: #{tpu_custom_call.1} parent=1 // pred_region
      %s18 = ssub.s32 128, 128
      %19 = vsyncadd [#allocation3], %s18
      %s21 = sshll.u32 [#allocation2], 4
      %s22 = int_to_ptr.vmem [resolvable:$true] %s21
      %24 = dma.hbm_to_vmem [thread:$0]  %s0, 128, %s22, [#allocation3]
    $region5: #{tpu_custom_call.1} parent=1 // pred_fallthru
      _
    // Predicated region
    $region6: #{tpu_custom_call.1} parent=1 // pred_check
      _
    $region7: #{tpu_custom_call.1} parent=1 // pred_check_branch
      %26 = sbr.rel (0) target = $region9
    $region8: #{tpu_custom_call.1} parent=1 // pred_region
      %s28 = ssub.s32 128, 128
      %29 = vsyncadd [#allocation6], %s28
      %s31 = sshll.u32 [#allocation5], 4
      %s32 = int_to_ptr.vmem [resolvable:$true] %s31
      %34 = dma.hbm_to_vmem [thread:$0]  %s1, 128, %s32, [#allocation6]
    $region9: #{tpu_custom_call.1} parent=1 // pred_fallthru
      _
    // Predicated region
    $region10: #{tpu_custom_call.1} parent=1 // pred_check
      _
    $region11: #{tpu_custom_call.1} parent=1 // pred_check_branch
      %36 = sbr.rel (0) target = $region13
    $region12: #{tpu_custom_call.1} parent=1 // pred_region
      %s38 = ssub.s32 128, 128
      %39 = vsyncadd [#allocation6], %s38
      %s41 = sshll.u32 [#allocation7], 4
      %s42 = int_to_ptr.vmem [resolvable:$true] %s41
      %44 = dma.hbm_to_vmem [thread:$0]  %s2, 128, %s42, [#allocation6]
    $region13: #{tpu_custom_call.1} parent=1 // pred_fallthru
      _
    // Predicated region
    $region14: #{tpu_custom_call.1} parent=1 // pred_check
      _
    $region15: #{tpu_custom_call.1} parent=1 // pred_check_branch
      %46 = sbr.rel (0) target = $region17
    $region16: #{tpu_custom_call.1} parent=1 // pred_region
      _
    $region17: #{tpu_custom_call.1} parent=1 // pred_fallthru
      _
    // Predicated region
    $region18: #{tpu_custom_call.1} parent=1 // pred_check
      _
    $region19: #{tpu_custom_call.1} parent=1 // pred_check_branch
      %48 = sbr.rel (0) target = $region21
    $region20: #{tpu_custom_call.1} parent=1 // pred_region
      %s50 = ssub.s32 1024, 1024
      %51 = vsyncadd [#allocation9], %s50
      %s52 = sshll.u32 [#allocation8], 4
      %s53 = int_to_ptr.vmem [resolvable:$true] %s52
      %58 = dma.hbm_to_vmem [thread:$0]  %s4, 1024, %s53, [#allocation9], 64, 64, 4
    $region21: #{tpu_custom_call.1} parent=1 // pred_fallthru
      _
    // Predicated region
    $region22: #{tpu_custom_call.1} parent=1 // pred_check
      _
    $region23: #{tpu_custom_call.1} parent=1 // pred_check_branch
      %60 = sbr.rel (0) target = $region25
    $region24: #{tpu_custom_call.1} parent=1 // pred_region
      _
    $region25: #{tpu_custom_call.1} parent=1 // pred_fallthru
      _
    // Predicated region
    $region26: #{tpu_custom_call.1} parent=1 // pred_check
      _
    $region27: #{tpu_custom_call.1} parent=1 // pred_check_branch
      %62 = sbr.rel (0) target = $region29
    $region28: #{tpu_custom_call.1} parent=1 // pred_region
      %63 = dma.done [#allocation3], 128
    $region29: #{tpu_custom_call.1} parent=1 // pred_fallthru
      _
    // Predicated region
    $region30: #{tpu_custom_call.1} parent=1 // pred_check
      _
    $region31: #{tpu_custom_call.1} parent=1 // pred_check_branch
      %65 = sbr.rel (0) target = $region33
    $region32: #{tpu_custom_call.1} parent=1 // pred_region
      %66 = dma.done [#allocation6], 128
    $region33: #{tpu_custom_call.1} parent=1 // pred_fallthru
      _
    // Predicated region
    $region34: #{tpu_custom_call.1} parent=1 // pred_check
      _
    $region35: #{tpu_custom_call.1} parent=1 // pred_check_branch
      %68 = sbr.rel (0) target = $region37
    $region36: #{tpu_custom_call.1} parent=1 // pred_region
      %69 = dma.done [#allocation6], 128
    $region37: #{tpu_custom_call.1} parent=1 // pred_fallthru
      _
    // Predicated region
    $region38: #{tpu_custom_call.1} parent=1 // pred_check
      _
    $region39: #{tpu_custom_call.1} parent=1 // pred_check_branch
      %71 = sbr.rel (0) target = $region41
    $region40: #{tpu_custom_call.1} parent=1 // pred_region
      %72 = dma.done [#allocation9], 1024
    $region41: #{tpu_custom_call.1} parent=1 // pred_fallthru
      _
    %v74 = vld [vmem:[#allocation8] sm:$0xf]
    %v75 = vld [vmem:[#allocation8 + $0x4] sm:$0xf]
    %v76 = vld [vmem:[#allocation8 + $0x8] sm:$0xf]
    %v77 = vld [vmem:[#allocation8 + $0xc] sm:$0xf]
    %v78 = vld [vmem:[#allocation8 + $0x10] sm:$0xf]
    %v79 = vld [vmem:[#allocation8 + $0x14] sm:$0xf]
    %v80 = vld [vmem:[#allocation8 + $0x18] sm:$0xf]
    %v81 = vld [vmem:[#allocation8 + $0x1c] sm:$0xf]
    %v82 = vld [vmem:[#allocation8 + $0x20] sm:$0xf]
    %v83 = vld [vmem:[#allocation8 + $0x24] sm:$0xf]
    %v84 = vld [vmem:[#allocation8 + $0x28] sm:$0xf]
    %v85 = vld [vmem:[#allocation8 + $0x2c] sm:$0xf]
    %v86 = vld [vmem:[#allocation8 + $0x30] sm:$0xf]
    %v87 = vld [vmem:[#allocation8 + $0x34] sm:$0xf]
    %v88 = vld [vmem:[#allocation8 + $0x38] sm:$0xf]
    %v89 = vld [vmem:[#allocation8 + $0x3c] sm:$0xf]
    %v90 = vld [vmem:[%s5] sm:$0x1]
    %v91 = vld [vmem:[#allocation2] sm:$0xff]
    %v92 = vpack.c.bf16 %v91, %v91
    %v97 = vunpack.c.l.b16 %v74
    %v98 = vunpack.c.l.b16 %v75
    %v99 = vunpack.c.l.b16 %v76
    %v100 = vunpack.c.l.b16 %v77
    %v101 = vpack.c.b16 %v98, %v97
    %v102 = vpack.c.b16 %v100, %v99
    %vm105 = vcmask 261120
    %v107 = vsel %vm105, %v92, 0
    %109 = vmatprep.subr.bf16.mxu0 0
    %110 = vmatpush1.bf16.msra.mxu0 %v101
    %111 = vmatprep.subr.bf16.mxu0 0
    %112 = vmatpush1.bf16.msra.mxu0 %v102
    %113 = vmatprep.subr.bf16.mxu0 0
    %114 = vmatpush1.bf16.msra.mxu0 0
    %115 = vmatprep.subr.bf16.mxu0 0
    %116 = vmatpush1.bf16.msra.mxu0 0
    %117 = vmatprep.subr.bf16.mxu0 0
    %118 = vmatpush1.bf16.msra.mxu0 0
    %119 = vmatprep.subr.bf16.mxu0 0
    %120 = vmatpush1.bf16.msra.mxu0 0
    %121 = vmatprep.subr.bf16.mxu0 0
    %122 = vmatpush1.bf16.msra.mxu0 0
    %123 = vmatprep.subr.bf16.mxu0 0
    %124 = vmatpush1.bf16.msra.mxu0 0
    %125 = vmatprep.subr.bf16.mxu0 0
    %126 = vmatpush1.bf16.msra.mxu0 0
    %127 = vmatprep.subr.bf16.mxu0 0
    %128 = vmatpush1.bf16.msra.mxu0 0
    %129 = vmatprep.subr.bf16.mxu0 0
    %130 = vmatpush1.bf16.msra.mxu0 0
    %131 = vmatprep.subr.bf16.mxu0 0
    %132 = vmatpush1.bf16.msra.mxu0 0
    %133 = vmatprep.subr.bf16.mxu0 0
    %134 = vmatpush1.bf16.msra.mxu0 0
    %135 = vmatprep.subr.bf16.mxu0 0
    %136 = vmatpush1.bf16.msra.mxu0 0
    %137 = vmatprep.subr.bf16.mxu0 0
    %138 = vmatpush1.bf16.msra.mxu0 0
    %139 = vmatprep.subr.bf16.mxu0 0
    %140 = vmatpush1.bf16.msra.mxu0 0
    %141 = vmatprep.mubr.bf16.mxu0 0
    %142 = vmatmul.mubr.bf16.gmra.mrb[0].mxu0 %v107
    %v143 = vpop.f32.mrb[0].mxu0
    %v144 = vadd.f32 0.0, %v143
    %v145 = vpop.f32.mrb[0].mxu0
    %v146 = vpop.f32.mrb[0].mxu0
    %v147 = vpop.f32.mrb[0].mxu0
    %148 = vdwg.mxu0
    %v150 = vlaneseq
    %v151 = vshrl.u32 %v150, 7
    %v152 = vsub.s32 0, %v151
    %v153 = vrot.slane %v90, %v152
    %v155 = vadd.f32 %v153, %v144
    %v156 = vld [vmem:[#allocation5] sm:$0xff]
    %v157 = vpack.c.bf16 %v156, %v156
    %v162 = vunpack.c.l.b16 %v78
    %v163 = vunpack.c.l.b16 %v79
    %v164 = vunpack.c.l.b16 %v80
    %v165 = vunpack.c.l.b16 %v81
    %v166 = vpack.c.b16 %v163, %v162
    %v167 = vpack.c.b16 %v165, %v164
    %v171 = vsel %vm105, %v157, 0
    %173 = vmatprep.subr.bf16.mxu0 0
    %174 = vmatpush1.bf16.msra.mxu0 %v166
    %175 = vmatprep.subr.bf16.mxu0 0
    %176 = vmatpush1.bf16.msra.mxu0 %v167
    %177 = vmatprep.subr.bf16.mxu0 0
    %178 = vmatpush1.bf16.msra.mxu0 0
    %179 = vmatprep.subr.bf16.mxu0 0
    %180 = vmatpush1.bf16.msra.mxu0 0
    %181 = vmatprep.subr.bf16.mxu0 0
    %182 = vmatpush1.bf16.msra.mxu0 0
    %183 = vmatprep.subr.bf16.mxu0 0
    %184 = vmatpush1.bf16.msra.mxu0 0
    %185 = vmatprep.subr.bf16.mxu0 0
    %186 = vmatpush1.bf16.msra.mxu0 0
    %187 = vmatprep.subr.bf16.mxu0 0
    %188 = vmatpush1.bf16.msra.mxu0 0
    %189 = vmatprep.subr.bf16.mxu0 0
    %190 = vmatpush1.bf16.msra.mxu0 0
    %191 = vmatprep.subr.bf16.mxu0 0
    %192 = vmatpush1.bf16.msra.mxu0 0
    %193 = vmatprep.subr.bf16.mxu0 0
    %194 = vmatpush1.bf16.msra.mxu0 0
    %195 = vmatprep.subr.bf16.mxu0 0
    %196 = vmatpush1.bf16.msra.mxu0 0
    %197 = vmatprep.subr.bf16.mxu0 0
    %198 = vmatpush1.bf16.msra.mxu0 0
    %199 = vmatprep.subr.bf16.mxu0 0
    %200 = vmatpush1.bf16.msra.mxu0 0
    %201 = vmatprep.subr.bf16.mxu0 0
    %202 = vmatpush1.bf16.msra.mxu0 0
    %203 = vmatprep.subr.bf16.mxu0 0
    %204 = vmatpush1.bf16.msra.mxu0 0
    %205 = vmatprep.mubr.bf16.mxu0 0
    %206 = vmatmul.mubr.bf16.gmra.mrb[0].mxu0 %v171
    %v207 = vpop.f32.mrb[0].mxu0
    %v208 = vadd.f32 0.0, %v207
    %v209 = vpop.f32.mrb[0].mxu0
    %v210 = vpop.f32.mrb[0].mxu0
    %v211 = vpop.f32.mrb[0].mxu0
    %212 = vdwg.mxu0
    %v213 = vadd.f32 %v155, %v208
    %v214 = vld [vmem:[#allocation7] sm:$0xff]
    %v215 = vpack.c.bf16 %v214, %v214
    %v220 = vunpack.c.l.b16 %v82
    %v221 = vunpack.c.l.b16 %v83
    %v222 = vunpack.c.l.b16 %v84
    %v223 = vunpack.c.l.b16 %v85
    %v224 = vpack.c.b16 %v221, %v220
    %v225 = vpack.c.b16 %v223, %v222
    %v229 = vsel %vm105, %v215, 0
    %231 = vmatprep.subr.bf16.mxu0 0
    %232 = vmatpush1.bf16.msra.mxu0 %v224
    %233 = vmatprep.subr.bf16.mxu0 0
    %234 = vmatpush1.bf16.msra.mxu0 %v225
    %235 = vmatprep.subr.bf16.mxu0 0
    %236 = vmatpush1.bf16.msra.mxu0 0
    %237 = vmatprep.subr.bf16.mxu0 0
    %238 = vmatpush1.bf16.msra.mxu0 0
    %239 = vmatprep.subr.bf16.mxu0 0
    %240 = vmatpush1.bf16.msra.mxu0 0
    %241 = vmatprep.subr.bf16.mxu0 0
    %242 = vmatpush1.bf16.msra.mxu0 0
    %243 = vmatprep.subr.bf16.mxu0 0
    %244 = vmatpush1.bf16.msra.mxu0 0
    %245 = vmatprep.subr.bf16.mxu0 0
    %246 = vmatpush1.bf16.msra.mxu0 0
    %247 = vmatprep.subr.bf16.mxu0 0
    %248 = vmatpush1.bf16.msra.mxu0 0
    %249 = vmatprep.subr.bf16.mxu0 0
    %250 = vmatpush1.bf16.msra.mxu0 0
    %251 = vmatprep.subr.bf16.mxu0 0
    %252 = vmatpush1.bf16.msra.mxu0 0
    %253 = vmatprep.subr.bf16.mxu0 0
    %254 = vmatpush1.bf16.msra.mxu0 0
    %255 = vmatprep.subr.bf16.mxu0 0
    %256 = vmatpush1.bf16.msra.mxu0 0
    %257 = vmatprep.subr.bf16.mxu0 0
    %258 = vmatpush1.bf16.msra.mxu0 0
    %259 = vmatprep.subr.bf16.mxu0 0
    %260 = vmatpush1.bf16.msra.mxu0 0
    %261 = vmatprep.subr.bf16.mxu0 0
    %262 = vmatpush1.bf16.msra.mxu0 0
    %263 = vmatprep.mubr.bf16.mxu0 0
    %264 = vmatmul.mubr.bf16.gmra.mrb[0].mxu0 %v229
    %v265 = vpop.f32.mrb[0].mxu0
    %v266 = vadd.f32 0.0, %v265
    %v267 = vpop.f32.mrb[0].mxu0
    %v268 = vpop.f32.mrb[0].mxu0
    %v269 = vpop.f32.mrb[0].mxu0
    %270 = vdwg.mxu0
    %v271 = vadd.f32 %v213, %v266
    %v272 = vld [vmem:[%s3] sm:$0xff]
    %v273 = vpack.c.bf16 %v272, %v272
    %v278 = vunpack.c.l.b16 %v86
    %v279 = vunpack.c.l.b16 %v87
    %v280 = vunpack.c.l.b16 %v88
    %v281 = vunpack.c.l.b16 %v89
    %v282 = vpack.c.b16 %v279, %v278
    %v283 = vpack.c.b16 %v281, %v280
    %v287 = vsel %vm105, %v273, 0
    %289 = vmatprep.subr.bf16.mxu0 0
    %290 = vmatpush1.bf16.msra.mxu0 %v282
    %291 = vmatprep.subr.bf16.mxu0 0
    %292 = vmatpush1.bf16.msra.mxu0 %v283
    %293 = vmatprep.subr.bf16.mxu0 0
    %294 = vmatpush1.bf16.msra.mxu0 0
    %295 = vmatprep.subr.bf16.mxu0 0
    %296 = vmatpush1.bf16.msra.mxu0 0
    %297 = vmatprep.subr.bf16.mxu0 0
    %298 = vmatpush1.bf16.msra.mxu0 0
    %299 = vmatprep.subr.bf16.mxu0 0
    %300 = vmatpush1.bf16.msra.mxu0 0
    %301 = vmatprep.subr.bf16.mxu0 0
    %302 = vmatpush1.bf16.msra.mxu0 0
    %303 = vmatprep.subr.bf16.mxu0 0
    %304 = vmatpush1.bf16.msra.mxu0 0
    %305 = vmatprep.subr.bf16.mxu0 0
    %306 = vmatpush1.bf16.msra.mxu0 0
    %307 = vmatprep.subr.bf16.mxu0 0
    %308 = vmatpush1.bf16.msra.mxu0 0
    %309 = vmatprep.subr.bf16.mxu0 0
    %310 = vmatpush1.bf16.msra.mxu0 0
    %311 = vmatprep.subr.bf16.mxu0 0
    %312 = vmatpush1.bf16.msra.mxu0 0
    %313 = vmatprep.subr.bf16.mxu0 0
    %314 = vmatpush1.bf16.msra.mxu0 0
    %315 = vmatprep.subr.bf16.mxu0 0
    %316 = vmatpush1.bf16.msra.mxu0 0
    %317 = vmatprep.subr.bf16.mxu0 0
    %318 = vmatpush1.bf16.msra.mxu0 0
    %319 = vmatprep.subr.bf16.mxu0 0
    %320 = vmatpush1.bf16.msra.mxu0 0
    %321 = vmatprep.mubr.bf16.mxu0 0
    %322 = vmatmul.mubr.bf16.gmra.mrb[0].mxu0 %v287
    %v323 = vpop.f32.mrb[0].mxu0
    %v324 = vadd.f32 0.0, %v323
    %v325 = vpop.f32.mrb[0].mxu0
    %v326 = vpop.f32.mrb[0].mxu0
    %v327 = vpop.f32.mrb[0].mxu0
    %328 = vdwg.mxu0
    %v329 = vadd.f32 %v271, %v324
    %v330 = vmax.f32 %v329, 0.0
    %331 = vst [vmem:[#allocation10] sm:$0xff] %v330
    // Predicated region
    $region42: #{tpu_custom_call.1} parent=1 // pred_check
      _
    $region43: #{tpu_custom_call.1} parent=1 // pred_check_branch
      %333 = sbr.rel (0) target = $region45
    $region44: #{tpu_custom_call.1} parent=1 // pred_region
      %s335 = ssub.s32 128, 128
      %336 = vsyncadd [#allocation4], %s335
      %s338 = sshll.u32 [#allocation10], 4
      %s339 = int_to_ptr.vmem [resolvable:$true] %s338
      %341 = dma.vmem_to_hbm [thread:$0]  %s339, 128, %s6, [#allocation4]
    $region45: #{tpu_custom_call.1} parent=1 // pred_fallthru
      _
    // Predicated region
    $region46: #{tpu_custom_call.1} parent=1 // pred_check
      _
    $region47: #{tpu_custom_call.1} parent=1 // pred_check_branch
      %343 = sbr.rel (0) target = $region49
    $region48: #{tpu_custom_call.1} parent=1 // pred_region
      %344 = dma.done [#allocation4], 128
    $region49: #{tpu_custom_call.1} parent=1 // pred_fallthru
      _
    %345 = vsyncpa [#allocation3], 1
    %346 = vsyncpa [#allocation6], 1
    %347 = vsyncpa [#allocation9], 1
    %348 = vsyncpa [#allocation4], 1

</llo_original>
